<compile_context>
chip_gen: v7x
topology: tpu7x:2x2x1
jax: 0.10.0
libtpu: 0.0.40
codegen_flags: <defaults>
</compile_context>

<pallas_src>
import math
import numpy as np
import jax
import jax.numpy as jnp
from jax.experimental import pallas as pl
from jax.experimental.pallas import tpu as pltpu


# ------------------------------- Pallas kernel ------------------------------

def _csat_kernel(x_ref, w1_ref, w2_ref, w3a_ref, w3b_ref,
                 ab12_ref, ab3_ref, sa_ref, o_ref):
    """Fused CSAT forward for one image; channels on sublanes, spatial on lanes."""
    x = x_ref[0]                                   # (C1, S) bf16

    ab12 = ab12_ref[...]                           # (c_, 4): s1, b1, s2, b2 (folded BN)
    s1, b1 = ab12[:, 0:1], ab12[:, 1:2]
    s2, b2 = ab12[:, 2:3], ab12[:, 3:4]
    ab3 = ab3_ref[...]                             # (c2, 2): s3, b3
    s3, b3 = ab3[:, 0:1], ab3[:, 1:2]
    p = sa_ref[...]                                # (c_, 8): cw, cb, sw, sb, gw, gb, mask, 0
    cw, cb = p[:, 0:1], p[:, 1:2]
    sw, sb = p[:, 2:3], p[:, 3:4]
    gw, gb = p[:, 4:5], p[:, 5:6]
    msk = p[:, 6:7]                                # 1.0 => channel-attention branch

    # cv1 / cv2: 1x1 conv (+ folded BN) + SiLU.  (Cout,Cin)@(Cin,S): lane-dense output.
    y1 = jnp.dot(w1_ref[...], x, preferred_element_type=jnp.float32) * s1 + b1
    y1 = y1 * jax.nn.sigmoid(y1)                   # (c_, S) f32
    y2 = jnp.dot(w2_ref[...], x, preferred_element_type=jnp.float32) * s2 + b2
    y2 = y2 * jax.nn.sigmoid(y2)                   # (c_, S) f32

    # ShuffleAttention gating on y1 (channel order preserved in the kernel; the
    # trailing channel shuffle is folded into w3a's columns).
    m = jnp.mean(y1, axis=-1, keepdims=True)                         # (c_, 1) spatial mean
    var = jnp.mean(jnp.square(y1 - m), axis=-1, keepdims=True)
    xn = (y1 - m) * jax.lax.rsqrt(var + 1e-5) * gw + gb              # per-channel GroupNorm
    pre = msk * (cw * m + cb) + (1.0 - msk) * (sw * xn + sb)         # branch select
    sa = y1 * jax.nn.sigmoid(pre)                                    # (c_, S)

    # cv3 on cat(channel_shuffle(sa), y2)  ==  w3a_folded @ sa + w3b @ y2
    z = (jnp.dot(w3a_ref[...], sa.astype(jnp.bfloat16),
                 preferred_element_type=jnp.float32)
         + jnp.dot(w3b_ref[...], y2.astype(jnp.bfloat16),
                   preferred_element_type=jnp.float32))
    z = z * s3 + b3
    o_ref[0] = (z * jax.nn.sigmoid(z)).astype(o_ref.dtype)           # SiLU, (c2, S)


# ------------------------------ module forward ------------------------------

def csat_forward(x_nchw, params):
    N, C1, H, W = x_nchw.shape
    S = H * W
    c_ = params["c_"]
    c2 = params["c2"]
    x = x_nchw.reshape(N, C1, S).astype(jnp.bfloat16)     # free reshape, half DMA bytes

    out = pl.pallas_call(
        _csat_kernel,
        out_shape=jax.ShapeDtypeStruct((N, c2, S), jnp.float32),
        grid=(N,),
        in_specs=[
            pl.BlockSpec((1, C1, S), lambda n: (n, 0, 0)),   # x, one image per step
            pl.BlockSpec((c_, C1), lambda n: (0, 0)),        # w1
            pl.BlockSpec((c_, C1), lambda n: (0, 0)),        # w2
            pl.BlockSpec((c2, c_), lambda n: (0, 0)),        # w3a (shuffle-folded)
            pl.BlockSpec((c2, c_), lambda n: (0, 0)),        # w3b
            pl.BlockSpec((c_, 4), lambda n: (0, 0)),         # cv1/cv2 folded BN scale/bias
            pl.BlockSpec((c2, 2), lambda n: (0, 0)),         # cv3 folded BN scale/bias
            pl.BlockSpec((c_, 8), lambda n: (0, 0)),         # SA params (per-channel)
        ],
        out_specs=pl.BlockSpec((1, c2, S), lambda n: (n, 0, 0)),
        compiler_params=pltpu.CompilerParams(
            dimension_semantics=("parallel",),
            vmem_limit_bytes=32 * 1024 * 1024,
        ),
    )(x, params["w1"], params["w2"], params["w3a"], params["w3b"],
      params["ab12"], params["ab3"], params["sa"])

    return out.reshape(N, c2, H, W)                        # back to NCHW (free reshape)


# ------------------------------ parameter init ------------------------------

def _fold_bn(key, cout):
    """Random eval-mode BatchNorm (eps=1e-3 as in ultralytics Conv) folded to scale/bias."""
    k1, k2, k3, k4 = jax.random.split(key, 4)
    gamma = 1.0 + 0.1 * jax.random.normal(k1, (cout,), jnp.float32)
    beta = 0.1 * jax.random.normal(k2, (cout,), jnp.float32)
    rmean = 0.1 * jax.random.normal(k3, (cout,), jnp.float32)
    rvar = jnp.abs(jax.random.normal(k4, (cout,), jnp.float32)) + 0.5
    scale = gamma / jnp.sqrt(rvar + 1e-3)
    bias = beta - rmean * scale
    return scale, bias


def make_csat_params(key, c1, c2, e=0.5, G=8):
    """CSAT(c1, c2): cv1/cv2: c1->c_, cv3: 2c_->c2, ShuffleAttention(channel=c_, G=8).
    (n, shortcut, g are unused by CSAT.forward.)"""
    c_ = int(c2 * e)
    assert c_ % (2 * G) == 0, "ShuffleAttention needs channel divisible by 2*G"
    ks = jax.random.split(key, 7)

    w1 = jax.random.normal(ks[0], (c_, c1), jnp.float32) / math.sqrt(c1)
    w2 = jax.random.normal(ks[1], (c_, c1), jnp.float32) / math.sqrt(c1)
    w3 = jax.random.normal(ks[2], (c2, 2 * c_), jnp.float32) / math.sqrt(2 * c_)
    s1, b1 = _fold_bn(ks[3], c_)
    s2, b2 = _fold_bn(ks[4], c_)
    s3, b3 = _fold_bn(ks[5], c2)

    # Fold channel_shuffle(groups=2) into cv3's SA-half weight columns:
    # shuffled[k = j*2+t] = sa[t*(c_/2)+j]  =>  w3a[:, i] = w3[:, :c_][:, sigma_inv(i)]
    # with sigma_inv(t*(c_/2)+j) = j*2+t.
    inv_perm = np.arange(c_).reshape(c_ // 2, 2).T.reshape(-1)
    w3a = w3[:, :c_][:, inv_perm]
    w3b = w3[:, c_:]

    # ShuffleAttention params live per half-group channel (size cg); expand to
    # per-channel vectors so the kernel needs no channel regrouping.
    cg = c_ // (2 * G)
    cpg = c_ // G
    kk = jax.random.split(ks[6], 6)
    # Torch default init is cweight=sweight=0, cbias=sbias=1, gn.weight=1, gn.bias=0;
    # use small deterministic random values so every path is numerically exercised.
    cweight = 0.5 * jax.random.normal(kk[0], (cg,), jnp.float32)
    cbias = 1.0 + 0.1 * jax.random.normal(kk[1], (cg,), jnp.float32)
    sweight = 0.5 * jax.random.normal(kk[2], (cg,), jnp.float32)
    sbias = 1.0 + 0.1 * jax.random.normal(kk[3], (cg,), jnp.float32)
    gnw = 1.0 + 0.1 * jax.random.normal(kk[4], (cg,), jnp.float32)
    gnb = 0.1 * jax.random.normal(kk[5], (cg,), jnp.float32)

    j = np.arange(c_) % cpg                      # position within each group
    is_ch = j < cg                               # first half -> channel-attention branch
    jc = np.where(is_ch, j, 0)                   # index into cweight/cbias
    js = np.where(is_ch, 0, j - cg)              # index into sweight/sbias/gn params
    sa_pack = jnp.stack([
        cweight[jc], cbias[jc], sweight[js], sbias[js], gnw[js], gnb[js],
        jnp.asarray(is_ch, jnp.float32), jnp.zeros((c_,), jnp.float32),
    ], axis=1)                                   # (c_, 8)

    return {
        "c_": c_, "c2": c2,
        "w1": w1.astype(jnp.bfloat16), "w2": w2.astype(jnp.bfloat16),
        "w3a": w3a.astype(jnp.bfloat16), "w3b": w3b.astype(jnp.bfloat16),
        "ab12": jnp.stack([s1, b1, s2, b2], axis=1),      # (c_, 4) f32
        "ab3": jnp.stack([s3, b3], axis=1),               # (c2, 2) f32
        "sa": sa_pack,                                    # (c_, 8) f32
    }


# ----------------------------------- main -----------------------------------

if __name__ == "__main__":
    key = jax.random.PRNGKey(0)
    kx, kp = jax.random.split(key)

    # CSAT(c1=16, c2=32, e=0.5) -> c_ = 16 (ShuffleAttention needs c_ % (2*G) == 0)
    N, C1, H, W = 2, 16, 16, 16
    C2 = 32

    x = jax.random.normal(kx, (N, C1, H, W), jnp.float32)   # NCHW, like PyTorch
    params = make_csat_params(kp, C1, C2, e=0.5, G=8)

    fwd = jax.jit(lambda xx: csat_forward(xx, params))
    out = jax.block_until_ready(fwd(x))

    assert out.shape == (N, C2, H, W), out.shape
    assert bool(jnp.all(jnp.isfinite(out)))
    print("KERNEL_OK")
</pallas_src>

<mosaic_0001>
module attributes {stable_mosaic.version = 11 : i64} {
  func.func @_csat_kernel(%arg0: i32, %arg1: memref<1x16x256xbf16, #tpu.memory_space<vmem>>, %arg2: memref<16x16xbf16, #tpu.memory_space<vmem>>, %arg3: memref<16x16xbf16, #tpu.memory_space<vmem>>, %arg4: memref<32x16xbf16, #tpu.memory_space<vmem>>, %arg5: memref<32x16xbf16, #tpu.memory_space<vmem>>, %arg6: memref<16x4xf32, #tpu.memory_space<vmem>>, %arg7: memref<32x2xf32, #tpu.memory_space<vmem>>, %arg8: memref<16x8xf32, #tpu.memory_space<vmem>>, %arg9: memref<1x32x256xf32, #tpu.memory_space<vmem>>) attributes {dimension_semantics = [#tpu.dimension_semantics<parallel>], iteration_bounds = array<i64: 2>, scalar_prefetch = 0 : i64, scratch_operands = 0 : i64, tpu.core_type = #tpu.core_type<tc>, window_params = [{transform_indices = @transform_0, window_bounds = array<i64: 1, 16, 256>}, {pipeline_mode = #tpu.pipeline_mode<synchronous>, transform_indices = @transform_1, window_bounds = array<i64: 16, 16>}, {pipeline_mode = #tpu.pipeline_mode<synchronous>, transform_indices = @transform_2, window_bounds = array<i64: 16, 16>}, {pipeline_mode = #tpu.pipeline_mode<synchronous>, transform_indices = @transform_3, window_bounds = array<i64: 32, 16>}, {pipeline_mode = #tpu.pipeline_mode<synchronous>, transform_indices = @transform_4, window_bounds = array<i64: 32, 16>}, {pipeline_mode = #tpu.pipeline_mode<synchronous>, transform_indices = @transform_5, window_bounds = array<i64: 16, 4>}, {pipeline_mode = #tpu.pipeline_mode<synchronous>, transform_indices = @transform_6, window_bounds = array<i64: 32, 2>}, {pipeline_mode = #tpu.pipeline_mode<synchronous>, transform_indices = @transform_7, window_bounds = array<i64: 16, 8>}, {transform_indices = @transform_8, window_bounds = array<i64: 1, 32, 256>}]} {
    %c0 = arith.constant 0 : index
    %c0_0 = arith.constant 0 : index
    %c0_1 = arith.constant 0 : index
    %0 = vector.load %arg1[%c0, %c0_0, %c0_1] : memref<1x16x256xbf16, #tpu.memory_space<vmem>>, vector<1x16x256xbf16>
    %1 = vector.shape_cast %0 : vector<1x16x256xbf16> to vector<16x256xbf16>
    %c0_2 = arith.constant 0 : index
    %c0_3 = arith.constant 0 : index
    %2 = vector.load %arg6[%c0_2, %c0_3] : memref<16x4xf32, #tpu.memory_space<vmem>>, vector<16x4xf32>
    %3 = vector.extract_strided_slice %2 {offsets = [0, 0], sizes = [16, 1], strides = [1, 1]} : vector<16x4xf32> to vector<16x1xf32>
    %4 = vector.extract_strided_slice %2 {offsets = [0, 1], sizes = [16, 1], strides = [1, 1]} : vector<16x4xf32> to vector<16x1xf32>
    %5 = vector.extract_strided_slice %2 {offsets = [0, 2], sizes = [16, 1], strides = [1, 1]} : vector<16x4xf32> to vector<16x1xf32>
    %6 = vector.extract_strided_slice %2 {offsets = [0, 3], sizes = [16, 1], strides = [1, 1]} : vector<16x4xf32> to vector<16x1xf32>
    %c0_4 = arith.constant 0 : index
    %c0_5 = arith.constant 0 : index
    %7 = vector.load %arg7[%c0_4, %c0_5] : memref<32x2xf32, #tpu.memory_space<vmem>>, vector<32x2xf32>
    %8 = vector.extract_strided_slice %7 {offsets = [0, 0], sizes = [32, 1], strides = [1, 1]} : vector<32x2xf32> to vector<32x1xf32>
    %9 = vector.extract_strided_slice %7 {offsets = [0, 1], sizes = [32, 1], strides = [1, 1]} : vector<32x2xf32> to vector<32x1xf32>
    %c0_6 = arith.constant 0 : index
    %c0_7 = arith.constant 0 : index
    %10 = vector.load %arg8[%c0_6, %c0_7] : memref<16x8xf32, #tpu.memory_space<vmem>>, vector<16x8xf32>
    %11 = vector.extract_strided_slice %10 {offsets = [0, 0], sizes = [16, 1], strides = [1, 1]} : vector<16x8xf32> to vector<16x1xf32>
    %12 = vector.extract_strided_slice %10 {offsets = [0, 1], sizes = [16, 1], strides = [1, 1]} : vector<16x8xf32> to vector<16x1xf32>
    %13 = vector.extract_strided_slice %10 {offsets = [0, 2], sizes = [16, 1], strides = [1, 1]} : vector<16x8xf32> to vector<16x1xf32>
    %14 = vector.extract_strided_slice %10 {offsets = [0, 3], sizes = [16, 1], strides = [1, 1]} : vector<16x8xf32> to vector<16x1xf32>
    %15 = vector.extract_strided_slice %10 {offsets = [0, 4], sizes = [16, 1], strides = [1, 1]} : vector<16x8xf32> to vector<16x1xf32>
    %16 = vector.extract_strided_slice %10 {offsets = [0, 5], sizes = [16, 1], strides = [1, 1]} : vector<16x8xf32> to vector<16x1xf32>
    %17 = vector.extract_strided_slice %10 {offsets = [0, 6], sizes = [16, 1], strides = [1, 1]} : vector<16x8xf32> to vector<16x1xf32>
    %c0_8 = arith.constant 0 : index
    %c0_9 = arith.constant 0 : index
    %18 = vector.load %arg2[%c0_8, %c0_9] : memref<16x16xbf16, #tpu.memory_space<vmem>>, vector<16x16xbf16>
    %cst = arith.constant dense<0.000000e+00> : vector<16x256xf32>
    %19 = tpu.matmul %18, %1, %cst {dimension_numbers = #tpu.dot_dimension_numbers<[1], [0], [0], [1], [0, 0, 1, 1], [], []>} : vector<16x16xbf16>, vector<16x256xbf16>, vector<16x256xf32> -> vector<16x256xf32>
    %20 = vector.broadcast %3 : vector<16x1xf32> to vector<16x256xf32>
    %21 = arith.mulf %19, %20 : vector<16x256xf32>
    %22 = vector.broadcast %4 : vector<16x1xf32> to vector<16x256xf32>
    %23 = arith.addf %21, %22 : vector<16x256xf32>
    %24 = arith.negf %23 : vector<16x256xf32>
    %25 = math.exp %24 : vector<16x256xf32>
    %cst_10 = arith.constant 1.000000e+00 : f32
    %26 = vector.broadcast %cst_10 : f32 to vector<16x256xf32>
    %27 = arith.addf %26, %25 : vector<16x256xf32>
    %28 = arith.divf %26, %27 : vector<16x256xf32>
    %29 = arith.mulf %23, %28 : vector<16x256xf32>
    %c0_11 = arith.constant 0 : index
    %c0_12 = arith.constant 0 : index
    %30 = vector.load %arg3[%c0_11, %c0_12] : memref<16x16xbf16, #tpu.memory_space<vmem>>, vector<16x16xbf16>
    %cst_13 = arith.constant dense<0.000000e+00> : vector<16x256xf32>
    %31 = tpu.matmul %30, %1, %cst_13 {dimension_numbers = #tpu.dot_dimension_numbers<[1], [0], [0], [1], [0, 0, 1, 1], [], []>} : vector<16x16xbf16>, vector<16x256xbf16>, vector<16x256xf32> -> vector<16x256xf32>
    %32 = vector.broadcast %5 : vector<16x1xf32> to vector<16x256xf32>
    %33 = arith.mulf %31, %32 : vector<16x256xf32>
    %34 = vector.broadcast %6 : vector<16x1xf32> to vector<16x256xf32>
    %35 = arith.addf %33, %34 : vector<16x256xf32>
    %36 = arith.negf %35 : vector<16x256xf32>
    %37 = math.exp %36 : vector<16x256xf32>
    %cst_14 = arith.constant 1.000000e+00 : f32
    %38 = vector.broadcast %cst_14 : f32 to vector<16x256xf32>
    %39 = arith.addf %38, %37 : vector<16x256xf32>
    %40 = arith.divf %38, %39 : vector<16x256xf32>
    %41 = arith.mulf %35, %40 : vector<16x256xf32>
    %cst_15 = arith.constant dense<0.000000e+00> : vector<16xf32>
    %42 = vector.multi_reduction <add>, %29, %cst_15 [1] : vector<16x256xf32> to vector<16xf32>
    %43 = vector.shape_cast %42 : vector<16xf32> to vector<16x1xf32>
    %cst_16 = arith.constant 2.560000e+02 : f32
    %44 = vector.broadcast %cst_16 : f32 to vector<16x1xf32>
    %45 = arith.divf %43, %44 : vector<16x1xf32>
    %46 = vector.broadcast %45 : vector<16x1xf32> to vector<16x256xf32>
    %47 = arith.subf %29, %46 : vector<16x256xf32>
    %48 = arith.mulf %47, %47 : vector<16x256xf32>
    %cst_17 = arith.constant dense<0.000000e+00> : vector<16xf32>
    %49 = vector.multi_reduction <add>, %48, %cst_17 [1] : vector<16x256xf32> to vector<16xf32>
    %50 = vector.shape_cast %49 : vector<16xf32> to vector<16x1xf32>
    %cst_18 = arith.constant 2.560000e+02 : f32
    %51 = vector.broadcast %cst_18 : f32 to vector<16x1xf32>
    %52 = arith.divf %50, %51 : vector<16x1xf32>
    %53 = vector.broadcast %45 : vector<16x1xf32> to vector<16x256xf32>
    %54 = arith.subf %29, %53 : vector<16x256xf32>
    %cst_19 = arith.constant 9.99999974E-6 : f32
    %55 = vector.broadcast %cst_19 : f32 to vector<16x1xf32>
    %56 = arith.addf %52, %55 : vector<16x1xf32>
    %57 = math.rsqrt %56 : vector<16x1xf32>
    %58 = vector.broadcast %57 : vector<16x1xf32> to vector<16x256xf32>
    %59 = arith.mulf %54, %58 : vector<16x256xf32>
    %60 = vector.broadcast %15 : vector<16x1xf32> to vector<16x256xf32>
    %61 = arith.mulf %59, %60 : vector<16x256xf32>
    %62 = vector.broadcast %16 : vector<16x1xf32> to vector<16x256xf32>
    %63 = arith.addf %61, %62 : vector<16x256xf32>
    %64 = arith.mulf %11, %45 : vector<16x1xf32>
    %65 = arith.addf %64, %12 : vector<16x1xf32>
    %66 = arith.mulf %17, %65 : vector<16x1xf32>
    %cst_20 = arith.constant 1.000000e+00 : f32
    %67 = vector.broadcast %cst_20 : f32 to vector<16x1xf32>
    %68 = arith.subf %67, %17 : vector<16x1xf32>
    %69 = vector.broadcast %13 : vector<16x1xf32> to vector<16x256xf32>
    %70 = arith.mulf %69, %63 : vector<16x256xf32>
    %71 = vector.broadcast %14 : vector<16x1xf32> to vector<16x256xf32>
    %72 = arith.addf %70, %71 : vector<16x256xf32>
    %73 = vector.broadcast %68 : vector<16x1xf32> to vector<16x256xf32>
    %74 = arith.mulf %73, %72 : vector<16x256xf32>
    %75 = vector.broadcast %66 : vector<16x1xf32> to vector<16x256xf32>
    %76 = arith.addf %75, %74 : vector<16x256xf32>
    %77 = arith.negf %76 : vector<16x256xf32>
    %78 = math.exp %77 : vector<16x256xf32>
    %cst_21 = arith.constant 1.000000e+00 : f32
    %79 = vector.broadcast %cst_21 : f32 to vector<16x256xf32>
    %80 = arith.addf %79, %78 : vector<16x256xf32>
    %81 = arith.divf %79, %80 : vector<16x256xf32>
    %82 = arith.mulf %29, %81 : vector<16x256xf32>
    %c0_22 = arith.constant 0 : index
    %c0_23 = arith.constant 0 : index
    %83 = vector.load %arg4[%c0_22, %c0_23] : memref<32x16xbf16, #tpu.memory_space<vmem>>, vector<32x16xbf16>
    %84 = arith.truncf %82 : vector<16x256xf32> to vector<16x256xbf16>
    %cst_24 = arith.constant dense<0.000000e+00> : vector<32x256xf32>
    %85 = tpu.matmul %83, %84, %cst_24 {dimension_numbers = #tpu.dot_dimension_numbers<[1], [0], [0], [1], [0, 0, 1, 1], [], []>} : vector<32x16xbf16>, vector<16x256xbf16>, vector<32x256xf32> -> vector<32x256xf32>
    %c0_25 = arith.constant 0 : index
    %c0_26 = arith.constant 0 : index
    %86 = vector.load %arg5[%c0_25, %c0_26] : memref<32x16xbf16, #tpu.memory_space<vmem>>, vector<32x16xbf16>
    %87 = arith.truncf %41 : vector<16x256xf32> to vector<16x256xbf16>
    %cst_27 = arith.constant dense<0.000000e+00> : vector<32x256xf32>
    %88 = tpu.matmul %86, %87, %cst_27 {dimension_numbers = #tpu.dot_dimension_numbers<[1], [0], [0], [1], [0, 0, 1, 1], [], []>} : vector<32x16xbf16>, vector<16x256xbf16>, vector<32x256xf32> -> vector<32x256xf32>
    %89 = arith.addf %85, %88 : vector<32x256xf32>
    %90 = vector.broadcast %8 : vector<32x1xf32> to vector<32x256xf32>
    %91 = arith.mulf %89, %90 : vector<32x256xf32>
    %92 = vector.broadcast %9 : vector<32x1xf32> to vector<32x256xf32>
    %93 = arith.addf %91, %92 : vector<32x256xf32>
    %94 = arith.negf %93 : vector<32x256xf32>
    %95 = math.exp %94 : vector<32x256xf32>
    %cst_28 = arith.constant 1.000000e+00 : f32
    %96 = vector.broadcast %cst_28 : f32 to vector<32x256xf32>
    %97 = arith.addf %96, %95 : vector<32x256xf32>
    %98 = arith.divf %96, %97 : vector<32x256xf32>
    %99 = arith.mulf %93, %98 : vector<32x256xf32>
    %c0_29 = arith.constant 0 : index
    %c0_30 = arith.constant 0 : index
    %c0_31 = arith.constant 0 : index
    %100 = vector.load %arg9[%c0_29, %c0_30, %c0_31] : memref<1x32x256xf32, #tpu.memory_space<vmem>>, vector<1x32x256xf32>
    %101 = vector.shape_cast %100 : vector<1x32x256xf32> to vector<32x256xf32>
    %102 = vector.shape_cast %99 : vector<32x256xf32> to vector<1x32x256xf32>
    tpu.vector_store %arg9[%c0_29, %c0_30, %c0_31], %102 {strides = array<i32>} : memref<1x32x256xf32, #tpu.memory_space<vmem>>, vector<1x32x256xf32>,
    return
  }
  func.func @transform_0(%arg0: i32) -> (i32, i32, i32) {
    %c0_i32 = arith.constant 0 : i32
    %c0_i32_0 = arith.constant 0 : i32
    %c0_i32_1 = arith.constant 0 : i32
    return %arg0, %c0_i32, %c0_i32_0 : i32, i32, i32
  }
  func.func @transform_1(%arg0: i32) -> (i32, i32) {
    %c0_i32 = arith.constant 0 : i32
    %c0_i32_0 = arith.constant 0 : i32
    %c0_i32_1 = arith.constant 0 : i32
    return %c0_i32, %c0_i32_0 : i32, i32
  }
  func.func @transform_2(%arg0: i32) -> (i32, i32) {
    %c0_i32 = arith.constant 0 : i32
    %c0_i32_0 = arith.constant 0 : i32
    %c0_i32_1 = arith.constant 0 : i32
    return %c0_i32, %c0_i32_0 : i32, i32
  }
  func.func @transform_3(%arg0: i32) -> (i32, i32) {
    %c0_i32 = arith.constant 0 : i32
    %c0_i32_0 = arith.constant 0 : i32
    %c0_i32_1 = arith.constant 0 : i32
    return %c0_i32, %c0_i32_0 : i32, i32
  }
  func.func @transform_4(%arg0: i32) -> (i32, i32) {
    %c0_i32 = arith.constant 0 : i32
    %c0_i32_0 = arith.constant 0 : i32
    %c0_i32_1 = arith.constant 0 : i32
    return %c0_i32, %c0_i32_0 : i32, i32
  }
  func.func @transform_5(%arg0: i32) -> (i32, i32) {
    %c0_i32 = arith.constant 0 : i32
    %c0_i32_0 = arith.constant 0 : i32
    %c0_i32_1 = arith.constant 0 : i32
    return %c0_i32, %c0_i32_0 : i32, i32
  }
  func.func @transform_6(%arg0: i32) -> (i32, i32) {
    %c0_i32 = arith.constant 0 : i32
    %c0_i32_0 = arith.constant 0 : i32
    %c0_i32_1 = arith.constant 0 : i32
    return %c0_i32, %c0_i32_0 : i32, i32
  }
  func.func @transform_7(%arg0: i32) -> (i32, i32) {
    %c0_i32 = arith.constant 0 : i32
    %c0_i32_0 = arith.constant 0 : i32
    %c0_i32_1 = arith.constant 0 : i32
    return %c0_i32, %c0_i32_0 : i32, i32
  }
  func.func @transform_8(%arg0: i32) -> (i32, i32, i32) {
    %c0_i32 = arith.constant 0 : i32
    %c0_i32_0 = arith.constant 0 : i32
    %c0_i32_1 = arith.constant 0 : i32
    return %arg0, %c0_i32, %c0_i32_0 : i32, i32, i32
  }
}

</mosaic_0001>

<llo_original>
// kernel: _lambda_.1
$region0: #{_lambda_.1}
  #allocation0 [shape = 'u32[]', space=smem, size = 0x4, offset = 0x4, fixed_abs, tag = 'smem constant byte address 0x4 - core index']
  #allocation1 [shape = 'u32[144,128]{1,0:T(1,128)}', space=vmem, size = 0x12000, scoped, tag = 'internal scratch']
  %s0 = inlined_call_operand.vmem [shape: bf16[2,16,256], index: 0, kind: input, shape index: {}]
  %s1 = inlined_call_operand.vmem [shape: bf16[16,16], index: 1, kind: input, shape index: {}]
  %s2 = inlined_call_operand.vmem [shape: bf16[16,16], index: 2, kind: input, shape index: {}]
  %s3 = inlined_call_operand.vmem [shape: bf16[32,16], index: 3, kind: input, shape index: {}]
  %s4 = inlined_call_operand.vmem [shape: bf16[32,16], index: 4, kind: input, shape index: {}]
  %s5 = inlined_call_operand.vmem [shape: f32[16,4], index: 5, kind: input, shape index: {}]
  %s6 = inlined_call_operand.vmem [shape: f32[32,2], index: 6, kind: input, shape index: {}]
  %s7 = inlined_call_operand.vmem [shape: f32[16,8], index: 7, kind: input, shape index: {}]
  %s8 = inlined_call_operand.vmem [shape: f32[2,32,256], index: 8, kind: output, shape index: {}]
  %s9 = sld [smem:[#allocation0]]
  $region65: #{_lambda_.1} parent=0
    _
  %s11 = ssub.s32 1, %s9
  %s12 = scalar_select 0, %s11, %s9
  loop: start=0, step=1, limit=4
  $region2: #{_lambda_.1} parent=0 // loop_pre_header
    _
  $region3: #{_lambda_.1} parent=0 // loop_header
    %s14 = sphi 0, %s18
    %p15 = scmp.ge.s32.totalorder %s14, 4
    %s24 = sphi 0, %s26
    %s27 = sphi 0, %s24
    %s28 = sphi 0, %s27
    %s44 = sphi 0, %s28
    %s48 = sphi 0, %s48
    %s50 = sphi 0, %s48
    %s51 = sphi 0, %s50
    %s65 = sphi 0, %s51
    %s69 = sphi 0, %s69
    %s71 = sphi 0, %s69
    %s72 = sphi 0, %s71
    %s86 = sphi 0, %s72
    %s90 = sphi 0, %s90
    %s92 = sphi 0, %s90
    %s93 = sphi 0, %s92
    %s107 = sphi 0, %s93
    %s111 = sphi 0, %s111
    %s113 = sphi 0, %s111
    %s114 = sphi 0, %s113
    %s128 = sphi 0, %s114
    %s132 = sphi 0, %s132
    %s134 = sphi 0, %s132
    %s135 = sphi 0, %s134
    %s149 = sphi 0, %s135
    %s153 = sphi 0, %s153
    %s155 = sphi 0, %s153
    %s156 = sphi 0, %s155
    %s170 = sphi 0, %s156
    %s174 = sphi 0, %s174
    %s176 = sphi 0, %s174
    %s177 = sphi 0, %s176
    %s191 = sphi 0, %s177
    %s197 = sphi 0, %s199
    %s200 = sphi 0, %s197
    %s201 = sphi 0, %s200
    %s217 = sphi 0, %s201
  $region4: #{_lambda_.1} parent=0 // loop_header_branch
    %17 = sbr.rel (%p15) target = $region8
  $region5: #{_lambda_.1} parent=0 // loop_body
    %s19 = ssub.s32 %s14, 1
    %s20 = ssub.s32 %s14, 2
    %s21 = sadd.s32 %s14, 1
    %s22 = ssub.s32 %s14, %s21
    %p23 = scmp.eq.s32.totalorder %s22, 0
    %s25 = sadd.s32 %s24, 1
    %s26 = scalar_select %p23, %s24, %s25
    %p29 = pneg %p23
    %p30 = scmp.eq.s32.totalorder %s14, 1
    %p31 = por %p29, %p30
    %p32 = scmp.ne.s32.totalorder %s24, %s27
    %p33 = scmp.eq.s32.totalorder %s14, 0
    %p34 = por %p32, %p33
    %p35 = scmp.ne.s32.totalorder %s24, %s27
    %p36 = scmp.eq.s32.totalorder %s19, 1
    %p37 = por %p35, %p36
    %p38 = scmp.ne.s32.totalorder %s27, %s28
    %p39 = scmp.eq.s32.totalorder %s19, 0
    %p40 = por %p38, %p39
    %p41 = scmp.ne.s32.totalorder %s27, %s28
    %p42 = scmp.eq.s32.totalorder %s20, 1
    %p43 = por %p41, %p42
    %p45 = scmp.ne.s32.totalorder %s28, %s44
    %p46 = scmp.eq.s32.totalorder %s20, 0
    %p47 = por %p45, %p46
    %s49 = sadd.s32 %s48, 1
    %p52 = scmp.eq.s32.totalorder %s14, 1
    %p53 = scmp.ne.s32.totalorder %s48, %s50
    %p54 = scmp.eq.s32.totalorder %s14, 0
    %p55 = por %p53, %p54
    %p56 = scmp.ne.s32.totalorder %s48, %s50
    %p57 = scmp.eq.s32.totalorder %s19, 1
    %p58 = por %p56, %p57
    %p59 = scmp.ne.s32.totalorder %s50, %s51
    %p60 = scmp.eq.s32.totalorder %s19, 0
    %p61 = por %p59, %p60
    %p62 = scmp.ne.s32.totalorder %s50, %s51
    %p63 = scmp.eq.s32.totalorder %s20, 1
    %p64 = por %p62, %p63
    %p66 = scmp.ne.s32.totalorder %s51, %s65
    %p67 = scmp.eq.s32.totalorder %s20, 0
    %p68 = por %p66, %p67
    %s70 = sadd.s32 %s69, 1
    %p73 = scmp.eq.s32.totalorder %s14, 1
    %p74 = scmp.ne.s32.totalorder %s69, %s71
    %p75 = scmp.eq.s32.totalorder %s14, 0
    %p76 = por %p74, %p75
    %p77 = scmp.ne.s32.totalorder %s69, %s71
    %p78 = scmp.eq.s32.totalorder %s19, 1
    %p79 = por %p77, %p78
    %p80 = scmp.ne.s32.totalorder %s71, %s72
    %p81 = scmp.eq.s32.totalorder %s19, 0
    %p82 = por %p80, %p81
    %p83 = scmp.ne.s32.totalorder %s71, %s72
    %p84 = scmp.eq.s32.totalorder %s20, 1
    %p85 = por %p83, %p84
    %p87 = scmp.ne.s32.totalorder %s72, %s86
    %p88 = scmp.eq.s32.totalorder %s20, 0
    %p89 = por %p87, %p88
    %s91 = sadd.s32 %s90, 1
    %p94 = scmp.eq.s32.totalorder %s14, 1
    %p95 = scmp.ne.s32.totalorder %s90, %s92
    %p96 = scmp.eq.s32.totalorder %s14, 0
    %p97 = por %p95, %p96
    %p98 = scmp.ne.s32.totalorder %s90, %s92
    %p99 = scmp.eq.s32.totalorder %s19, 1
    %p100 = por %p98, %p99
    %p101 = scmp.ne.s32.totalorder %s92, %s93
    %p102 = scmp.eq.s32.totalorder %s19, 0
    %p103 = por %p101, %p102
    %p104 = scmp.ne.s32.totalorder %s92, %s93
    %p105 = scmp.eq.s32.totalorder %s20, 1
    %p106 = por %p104, %p105
    %p108 = scmp.ne.s32.totalorder %s93, %s107
    %p109 = scmp.eq.s32.totalorder %s20, 0
    %p110 = por %p108, %p109
    %s112 = sadd.s32 %s111, 1
    %p115 = scmp.eq.s32.totalorder %s14, 1
    %p116 = scmp.ne.s32.totalorder %s111, %s113
    %p117 = scmp.eq.s32.totalorder %s14, 0
    %p118 = por %p116, %p117
    %p119 = scmp.ne.s32.totalorder %s111, %s113
    %p120 = scmp.eq.s32.totalorder %s19, 1
    %p121 = por %p119, %p120
    %p122 = scmp.ne.s32.totalorder %s113, %s114
    %p123 = scmp.eq.s32.totalorder %s19, 0
    %p124 = por %p122, %p123
    %p125 = scmp.ne.s32.totalorder %s113, %s114
    %p126 = scmp.eq.s32.totalorder %s20, 1
    %p127 = por %p125, %p126
    %p129 = scmp.ne.s32.totalorder %s114, %s128
    %p130 = scmp.eq.s32.totalorder %s20, 0
    %p131 = por %p129, %p130
    %s133 = sadd.s32 %s132, 1
    %p136 = scmp.eq.s32.totalorder %s14, 1
    %p137 = scmp.ne.s32.totalorder %s132, %s134
    %p138 = scmp.eq.s32.totalorder %s14, 0
    %p139 = por %p137, %p138
    %p140 = scmp.ne.s32.totalorder %s132, %s134
    %p141 = scmp.eq.s32.totalorder %s19, 1
    %p142 = por %p140, %p141
    %p143 = scmp.ne.s32.totalorder %s134, %s135
    %p144 = scmp.eq.s32.totalorder %s19, 0
    %p145 = por %p143, %p144
    %p146 = scmp.ne.s32.totalorder %s134, %s135
    %p147 = scmp.eq.s32.totalorder %s20, 1
    %p148 = por %p146, %p147
    %p150 = scmp.ne.s32.totalorder %s135, %s149
    %p151 = scmp.eq.s32.totalorder %s20, 0
    %p152 = por %p150, %p151
    %s154 = sadd.s32 %s153, 1
    %p157 = scmp.eq.s32.totalorder %s14, 1
    %p158 = scmp.ne.s32.totalorder %s153, %s155
    %p159 = scmp.eq.s32.totalorder %s14, 0
    %p160 = por %p158, %p159
    %p161 = scmp.ne.s32.totalorder %s153, %s155
    %p162 = scmp.eq.s32.totalorder %s19, 1
    %p163 = por %p161, %p162
    %p164 = scmp.ne.s32.totalorder %s155, %s156
    %p165 = scmp.eq.s32.totalorder %s19, 0
    %p166 = por %p164, %p165
    %p167 = scmp.ne.s32.totalorder %s155, %s156
    %p168 = scmp.eq.s32.totalorder %s20, 1
    %p169 = por %p167, %p168
    %p171 = scmp.ne.s32.totalorder %s156, %s170
    %p172 = scmp.eq.s32.totalorder %s20, 0
    %p173 = por %p171, %p172
    %s175 = sadd.s32 %s174, 1
    %p178 = scmp.eq.s32.totalorder %s14, 1
    %p179 = scmp.ne.s32.totalorder %s174, %s176
    %p180 = scmp.eq.s32.totalorder %s14, 0
    %p181 = por %p179, %p180
    %p182 = scmp.ne.s32.totalorder %s174, %s176
    %p183 = scmp.eq.s32.totalorder %s19, 1
    %p184 = por %p182, %p183
    %p185 = scmp.ne.s32.totalorder %s176, %s177
    %p186 = scmp.eq.s32.totalorder %s19, 0
    %p187 = por %p185, %p186
    %p188 = scmp.ne.s32.totalorder %s176, %s177
    %p189 = scmp.eq.s32.totalorder %s20, 1
    %p190 = por %p188, %p189
    %p192 = scmp.ne.s32.totalorder %s177, %s191
    %p193 = scmp.eq.s32.totalorder %s20, 0
    %p194 = por %p192, %p193
    %s195 = ssub.s32 %s14, %s21
    %p196 = scmp.eq.s32.totalorder %s195, 0
    %s198 = sadd.s32 %s197, 1
    %s199 = scalar_select %p196, %s197, %s198
    %p202 = pneg %p196
    %p203 = scmp.eq.s32.totalorder %s14, 1
    %p204 = por %p202, %p203
    %p205 = scmp.ne.s32.totalorder %s197, %s200
    %p206 = scmp.eq.s32.totalorder %s14, 0
    %p207 = por %p205, %p206
    %p208 = scmp.ne.s32.totalorder %s197, %s200
    %p209 = scmp.eq.s32.totalorder %s19, 1
    %p210 = por %p208, %p209
    %p211 = scmp.ne.s32.totalorder %s200, %s201
    %p212 = scmp.eq.s32.totalorder %s19, 0
    %p213 = por %p211, %p212
    %p214 = scmp.ne.s32.totalorder %s200, %s201
    %p215 = scmp.eq.s32.totalorder %s20, 1
    %p216 = por %p214, %p215
    %p218 = scmp.ne.s32.totalorder %s201, %s217
    %p219 = scmp.eq.s32.totalorder %s20, 0
    %p220 = por %p218, %p219
    %p221 = scmp.le.s32.totalorder 1, %s14
    %p222 = scmp.lt.s32.totalorder %s14, 3
    %p223 = pnand %p221, %p222
    %p224 = pneg %p223
    // Predicated region
    $region9: #{_lambda_.1} parent=5 // pred_check
      _
    $region10: #{_lambda_.1} parent=5 // pred_check_branch
      %226 = sbr.rel (%p223) target = $region12
    $region11: #{_lambda_.1} parent=5 // pred_region
      %s227 = ssub.s32 %s14, 1
      // Predicated region
      $region13: #{_lambda_.1} parent=11 // pred_check
        %p228 = pneg %p61
      $region14: #{_lambda_.1} parent=11 // pred_check_branch
        %230 = sbr.rel (%p228) target = $region16
      $region15: #{_lambda_.1} parent=11 // pred_region
        _
      $region16: #{_lambda_.1} parent=11 // pred_fallthru
        _
      // Predicated region
      $region17: #{_lambda_.1} parent=11 // pred_check
        %p231 = pneg %p82
      $region18: #{_lambda_.1} parent=11 // pred_check_branch
        %233 = sbr.rel (%p231) target = $region20
      $region19: #{_lambda_.1} parent=11 // pred_region
        _
      $region20: #{_lambda_.1} parent=11 // pred_fallthru
        _
      // Predicated region
      $region21: #{_lambda_.1} parent=11 // pred_check
        %p234 = pneg %p103
      $region22: #{_lambda_.1} parent=11 // pred_check_branch
        %236 = sbr.rel (%p234) target = $region24
      $region23: #{_lambda_.1} parent=11 // pred_region
        _
      $region24: #{_lambda_.1} parent=11 // pred_fallthru
        _
      // Predicated region
      $region25: #{_lambda_.1} parent=11 // pred_check
        %p237 = pneg %p124
      $region26: #{_lambda_.1} parent=11 // pred_check_branch
        %239 = sbr.rel (%p237) target = $region28
      $region27: #{_lambda_.1} parent=11 // pred_region
        _
      $region28: #{_lambda_.1} parent=11 // pred_fallthru
        _
      // Predicated region
      $region29: #{_lambda_.1} parent=11 // pred_check
        %p240 = pneg %p145
      $region30: #{_lambda_.1} parent=11 // pred_check_branch
        %242 = sbr.rel (%p240) target = $region32
      $region31: #{_lambda_.1} parent=11 // pred_region
        _
      $region32: #{_lambda_.1} parent=11 // pred_fallthru
        _
      // Predicated region
      $region33: #{_lambda_.1} parent=11 // pred_check
        %p243 = pneg %p166
      $region34: #{_lambda_.1} parent=11 // pred_check_branch
        %245 = sbr.rel (%p243) target = $region36
      $region35: #{_lambda_.1} parent=11 // pred_region
        _
      $region36: #{_lambda_.1} parent=11 // pred_fallthru
        _
      // Predicated region
      $region37: #{_lambda_.1} parent=11 // pred_check
        %p246 = pneg %p187
      $region38: #{_lambda_.1} parent=11 // pred_check_branch
        %248 = sbr.rel (%p246) target = $region40
      $region39: #{_lambda_.1} parent=11 // pred_region
        _
      $region40: #{_lambda_.1} parent=11 // pred_fallthru
        _
    $region12: #{_lambda_.1} parent=5 // pred_fallthru
      _
    %p249 = scmp.lt.s32.totalorder %s14, 2
    // Predicated region
    $region41: #{_lambda_.1} parent=5 // pred_check
      %p250 = pneg %p249
    $region42: #{_lambda_.1} parent=5 // pred_check_branch
      %252 = sbr.rel (%p250) target = $region44
    $region43: #{_lambda_.1} parent=5 // pred_region
      // Predicated region
      $region45: #{_lambda_.1} parent=43 // pred_check
        %p253 = pneg %p34
      $region46: #{_lambda_.1} parent=43 // pred_check_branch
        %255 = sbr.rel (%p253) target = $region48
      $region47: #{_lambda_.1} parent=43 // pred_region
        %p256 = scmp.lt.s32.totalorder %s14, 1
        %s257 = scalar_select %p256, %s14, 1
        %s258 = smul.addr %s257, 4
        %s259 = smul.addr %s258, 4
        %s260 = scalar_lea.vmem %s0, %s259
      $region48: #{_lambda_.1} parent=43 // pred_fallthru
        _
    $region44: #{_lambda_.1} parent=5 // pred_fallthru
      _
    %p261 = scmp.le.s32.totalorder 1, %s14
    %p262 = scmp.lt.s32.totalorder %s14, 3
    %p263 = pnand %p261, %p262
    %p264 = pneg %p263
    // Predicated region
    $region49: #{_lambda_.1} parent=5 // pred_check
      _
    $region50: #{_lambda_.1} parent=5 // pred_check_branch
      %266 = sbr.rel (%p263) target = $region52
    $region51: #{_lambda_.1} parent=5 // pred_region
      %s267 = ssub.s32 %s14, 1
      %p268 = scmp.lt.s32.totalorder %s19, 1
      %s269 = scalar_select %p268, %s19, 1
      %s270 = smul.addr %s269, 4
      %s271 = smul.addr %s270, 4
      %s272 = scalar_lea.vmem %s0, %s271
      %p273 = pneg %p40
      %p274 = pneg %p37
      %p275 = pneg %p61
      %p276 = pneg %p58
      %p277 = pneg %p82
      %p278 = pneg %p79
      %p279 = pneg %p103
      %p280 = pneg %p100
      %p281 = pneg %p124
      %p282 = pneg %p121
      %p283 = pneg %p145
      %p284 = pneg %p142
      %p285 = pneg %p166
      %p286 = pneg %p163
      %p287 = pneg %p187
      %p288 = pneg %p184
      %p289 = pneg %p213
      %p290 = pneg %p210
      %p291 = scmp.lt.s32.totalorder %s19, 1
      %s292 = scalar_select %p291, %s19, 1
      %s293 = smul.addr %s292, 8
      %s294 = smul.addr %s293, 8
      %s295 = scalar_lea.vmem %s8, %s294
      %p296 = scmp.lt.s32.totalorder %s19, 1
      %s297 = scalar_select %p296, %s19, 1
      %s298 = smul.addr %s297, 4
      %s299 = smul.addr %s298, 4
      %s300 = scalar_lea.vmem %s0, %s299
      %p301 = scmp.lt.s32.totalorder %s19, 1
      %s302 = scalar_select %p301, %s19, 1
      %s303 = smul.addr %s302, 8
      %s304 = smul.addr %s303, 8
      %s305 = scalar_lea.vmem %s8, %s304
      %v307 = vld [vmem:[%s300] sm:$0xff]
      %v308 = vld [vmem:[%s300 + $0x8] sm:$0xff]
      %v309 = vld [vmem:[%s5] sm:$0xff]
      %v310 = vld [vmem:[%s5 + $0x8] sm:$0xff]
      %v311 = vld [vmem:[%s6] sm:$0xff]
      %v312 = vld [vmem:[%s6 + $0x8] sm:$0xff]
      %v313 = vld [vmem:[%s6 + $0x10] sm:$0xff]
      %v314 = vld [vmem:[%s6 + $0x18] sm:$0xff]
      %v315 = vld [vmem:[%s7] sm:$0xff]
      %v316 = vld [vmem:[%s7 + $0x8] sm:$0xff]
      %v317 = vld [vmem:[%s1] sm:$0xf]
      %v318 = vld [vmem:[%s1 + $0x4] sm:$0xf]
      %v321 = vunpack.c.l.b16 %v317
      %v322 = vunpack.c.l.b16 %v318
      %v323 = vpack.c.b16 %v322, %v321
      %v326 = vunpack.c.l.b16 %v307
      %v327 = vunpack.c.h.b16 %v307
      %v328 = vunpack.c.l.b16 %v308
      %v329 = vunpack.c.h.b16 %v308
      %v330 = vpack.c.b16 %v328, %v326
      %v331 = vpack.c.b16 %v329, %v327
      %vm334 = vcmask 130048
      %v336 = vsel %vm334, %v323, 0
      %338 = vmatprep.subr.bf16.mxu0 %v331
      %339 = vmatpush1.bf16.msra.mxu0 %v330
      %340 = vmatprep.subr.bf16.mxu0 0
      %341 = vmatpush1.bf16.msra.mxu0 0
      %342 = vmatprep.subr.bf16.mxu0 0
      %343 = vmatpush1.bf16.msra.mxu0 0
      %344 = vmatprep.subr.bf16.mxu0 0
      %345 = vmatpush1.bf16.msra.mxu0 0
      %346 = vmatprep.subr.bf16.mxu0 0
      %347 = vmatpush1.bf16.msra.mxu0 0
      %348 = vmatprep.subr.bf16.mxu0 0
      %349 = vmatpush1.bf16.msra.mxu0 0
      %350 = vmatprep.subr.bf16.mxu0 0
      %351 = vmatpush1.bf16.msra.mxu0 0
      %352 = vmatprep.subr.bf16.mxu0 0
      %353 = vmatpush1.bf16.msra.mxu0 0
      %354 = vmatprep.subr.bf16.mxu0 0
      %355 = vmatpush1.bf16.msra.mxu0 0
      %356 = vmatprep.subr.bf16.mxu0 0
      %357 = vmatpush1.bf16.msra.mxu0 0
      %358 = vmatprep.subr.bf16.mxu0 0
      %359 = vmatpush1.bf16.msra.mxu0 0
      %360 = vmatprep.subr.bf16.mxu0 0
      %361 = vmatpush1.bf16.msra.mxu0 0
      %362 = vmatprep.subr.bf16.mxu0 0
      %363 = vmatpush1.bf16.msra.mxu0 0
      %364 = vmatprep.subr.bf16.mxu0 0
      %365 = vmatpush1.bf16.msra.mxu0 0
      %366 = vmatprep.subr.bf16.mxu0 0
      %367 = vmatpush1.bf16.msra.mxu0 0
      %368 = vmatprep.subr.bf16.mxu0 0
      %369 = vmatpush1.bf16.msra.mxu0 0
      %370 = vmatprep.mubr.bf16.mxu0 0
      %371 = vmatmul.mubr.bf16.gmra.mrb[0].mxu0 %v336
      %v372 = vpop.f32.mrb[0].mxu0
      %v373 = vadd.f32 0.0, %v372
      %v374 = vpop.f32.mrb[0].mxu0
      %v375 = vadd.f32 0.0, %v374
      %v376 = vpop.f32.mrb[0].mxu0
      %v377 = vadd.f32 0.0, %v376
      %v378 = vpop.f32.mrb[0].mxu0
      %v379 = vadd.f32 0.0, %v378
      %380 = vdwg.mxu0
      %382 = vset.pattern.permute.xlu0 0
      %383 = vperm.xlu0 %382, %v309
      %v384 = vpop.permute.xlu0 %383
      %387 = vset.pattern.permute.xlu0 0
      %388 = vperm.xlu0 %387, %v310
      %v389 = vpop.permute.xlu0 %388
      %v391 = vmul.f32 %v373, %v384
      %v392 = vmul.f32 %v375, %v384
      %v393 = vmul.f32 %v377, %v389
      %v394 = vmul.f32 %v379, %v389
      %395 = vset.pattern.permute.xlu0 1
      %396 = vperm.xlu0 %395, %v309
      %v397 = vpop.permute.xlu0 %396
      %399 = vset.pattern.permute.xlu0 1
      %400 = vperm.xlu0 %399, %v310
      %v401 = vpop.permute.xlu0 %400
      %v403 = vadd.f32 %v391, %v397
      %v404 = vadd.f32 %v392, %v397
      %v405 = vadd.f32 %v393, %v401
      %v406 = vadd.f32 %v394, %v401
      %v407 = vxor.u32 %v403, 2147483648
      %v408 = vxor.u32 %v404, 2147483648
      %v409 = vxor.u32 %v405, 2147483648
      %v410 = vxor.u32 %v406, 2147483648
      %v411 = vmul.f32 %v407, 1.442695
      %v412 = vpow.pop %v411
      %v413 = vmul.f32 %v408, 1.442695
      %v414 = vpow.pop %v413
      %v415 = vmul.f32 %v409, 1.442695
      %v416 = vpow.pop %v415
      %v417 = vmul.f32 %v410, 1.442695
      %v418 = vpow.pop %v417
      %v419 = vadd.f32 %v412, 1.0
      %v420 = vadd.f32 %v414, 1.0
      %v421 = vadd.f32 %v416, 1.0
      %v422 = vadd.f32 %v418, 1.0
      %v423 = vrcp.pop %v419
      %v424 = vmul.f32 1.0, %v423
      %v425 = vrcp.pop %v420
      %v426 = vmul.f32 1.0, %v425
      %v427 = vrcp.pop %v421
      %v428 = vmul.f32 1.0, %v427
      %v429 = vrcp.pop %v422
      %v430 = vmul.f32 1.0, %v429
      %v431 = vmul.f32 %v403, %v424
      %v432 = vmul.f32 %v404, %v426
      %v433 = vmul.f32 %v405, %v428
      %v434 = vmul.f32 %v406, %v430
      %v435 = vld [vmem:[%s2] sm:$0xf]
      %v436 = vld [vmem:[%s2 + $0x4] sm:$0xf]
      %v439 = vunpack.c.l.b16 %v435
      %v440 = vunpack.c.l.b16 %v436
      %v441 = vpack.c.b16 %v440, %v439
      %v443 = vsel %vm334, %v441, 0
      %445 = vmatprep.subr.bf16.mxu0 %v331
      %446 = vmatpush1.bf16.msra.mxu0 %v330
      %447 = vmatprep.subr.bf16.mxu0 0
      %448 = vmatpush1.bf16.msra.mxu0 0
      %449 = vmatprep.subr.bf16.mxu0 0
      %450 = vmatpush1.bf16.msra.mxu0 0
      %451 = vmatprep.subr.bf16.mxu0 0
      %452 = vmatpush1.bf16.msra.mxu0 0
      %453 = vmatprep.subr.bf16.mxu0 0
      %454 = vmatpush1.bf16.msra.mxu0 0
      %455 = vmatprep.subr.bf16.mxu0 0
      %456 = vmatpush1.bf16.msra.mxu0 0
      %457 = vmatprep.subr.bf16.mxu0 0
      %458 = vmatpush1.bf16.msra.mxu0 0
      %459 = vmatprep.subr.bf16.mxu0 0
      %460 = vmatpush1.bf16.msra.mxu0 0
      %461 = vmatprep.subr.bf16.mxu0 0
      %462 = vmatpush1.bf16.msra.mxu0 0
      %463 = vmatprep.subr.bf16.mxu0 0
      %464 = vmatpush1.bf16.msra.mxu0 0
      %465 = vmatprep.subr.bf16.mxu0 0
      %466 = vmatpush1.bf16.msra.mxu0 0
      %467 = vmatprep.subr.bf16.mxu0 0
      %468 = vmatpush1.bf16.msra.mxu0 0
      %469 = vmatprep.subr.bf16.mxu0 0
      %470 = vmatpush1.bf16.msra.mxu0 0
      %471 = vmatprep.subr.bf16.mxu0 0
      %472 = vmatpush1.bf16.msra.mxu0 0
      %473 = vmatprep.subr.bf16.mxu0 0
      %474 = vmatpush1.bf16.msra.mxu0 0
      %475 = vmatprep.subr.bf16.mxu0 0
      %476 = vmatpush1.bf16.msra.mxu0 0
      %477 = vmatprep.mubr.bf16.mxu0 0
      %478 = vmatmul.mubr.bf16.gmra.mrb[0].mxu0 %v443
      %v479 = vpop.f32.mrb[0].mxu0
      %v480 = vadd.f32 0.0, %v479
      %v481 = vpop.f32.mrb[0].mxu0
      %v482 = vadd.f32 0.0, %v481
      %v483 = vpop.f32.mrb[0].mxu0
      %v484 = vadd.f32 0.0, %v483
      %v485 = vpop.f32.mrb[0].mxu0
      %v486 = vadd.f32 0.0, %v485
      %487 = vdwg.mxu0
      %488 = vset.pattern.permute.xlu0 2
      %489 = vperm.xlu0 %488, %v309
      %v490 = vpop.permute.xlu0 %489
      %492 = vset.pattern.permute.xlu0 2
      %493 = vperm.xlu0 %492, %v310
      %v494 = vpop.permute.xlu0 %493
      %v496 = vmul.f32 %v480, %v490
      %v497 = vmul.f32 %v482, %v490
      %v498 = vmul.f32 %v484, %v494
      %v499 = vmul.f32 %v486, %v494
      %500 = vset.pattern.permute.xlu0 3
      %501 = vperm.xlu0 %500, %v309
      %v502 = vpop.permute.xlu0 %501
      %504 = vset.pattern.permute.xlu0 3
      %505 = vperm.xlu0 %504, %v310
      %v506 = vpop.permute.xlu0 %505
      %v508 = vadd.f32 %v496, %v502
      %v509 = vadd.f32 %v497, %v502
      %v510 = vadd.f32 %v498, %v506
      %v511 = vadd.f32 %v499, %v506
      %v512 = vxor.u32 %v508, 2147483648
      %v513 = vxor.u32 %v509, 2147483648
      %v514 = vxor.u32 %v510, 2147483648
      %v515 = vxor.u32 %v511, 2147483648
      %v516 = vmul.f32 %v512, 1.442695
      %v517 = vpow.pop %v516
      %v518 = vmul.f32 %v513, 1.442695
      %v519 = vpow.pop %v518
      %v520 = vmul.f32 %v514, 1.442695
      %v521 = vpow.pop %v520
      %v522 = vmul.f32 %v515, 1.442695
      %v523 = vpow.pop %v522
      %v524 = vadd.f32 %v517, 1.0
      %v525 = vadd.f32 %v519, 1.0
      %v526 = vadd.f32 %v521, 1.0
      %v527 = vadd.f32 %v523, 1.0
      %v528 = vrcp.pop %v524
      %v529 = vmul.f32 1.0, %v528
      %v530 = vrcp.pop %v525
      %v531 = vmul.f32 1.0, %v530
      %v532 = vrcp.pop %v526
      %v533 = vmul.f32 1.0, %v532
      %v534 = vrcp.pop %v527
      %v535 = vmul.f32 1.0, %v534
      %v536 = vmul.f32 %v508, %v529
      %v537 = vmul.f32 %v509, %v531
      %v538 = vmul.f32 %v510, %v533
      %v539 = vmul.f32 %v511, %v535
      %v540 = vadd.f32 %v431, %v432
      %541 = vadd.xlane.f32.xlu0 %v540
      %v542 = vpop.xlane.xlu0 %541
      %v543 = vadd.f32 %v433, %v434
      %544 = vadd.xlane.f32.xlu0 %v543
      %v545 = vpop.xlane.xlu0 %544
      %v546 = vrcp.pop 256.0
      %v547 = vmul.f32 %v542, %v546
      %v548 = vmul.f32 %v545, %v546
      %v549 = vsub.f32 %v431, %v547
      %v550 = vsub.f32 %v432, %v547
      %v551 = vsub.f32 %v433, %v548
      %v552 = vsub.f32 %v434, %v548
      %v553 = vmul.f32 %v549, %v549
      %v554 = vmul.f32 %v550, %v550
      %v555 = vmul.f32 %v551, %v551
      %v556 = vmul.f32 %v552, %v552
      %v557 = vadd.f32 %v553, %v554
      %558 = vadd.xlane.f32.xlu0 %v557
      %v559 = vpop.xlane.xlu0 %558
      %v560 = vadd.f32 %v555, %v556
      %561 = vadd.xlane.f32.xlu0 %v560
      %v562 = vpop.xlane.xlu0 %561
      %v563 = vmul.f32 %v559, %v546
      %v564 = vmul.f32 %v562, %v546
      %v565 = vadd.f32 %v563, 1e-05
      %v566 = vadd.f32 %v564, 1e-05
      %v567 = vrsqrt.pop %v565
      %v568 = vrsqrt.pop %v566
      %v569 = vmul.f32 %v549, %v567
      %v570 = vmul.f32 %v550, %v567
      %v571 = vmul.f32 %v551, %v568
      %v572 = vmul.f32 %v552, %v568
      %574 = vset.pattern.permute.xlu0 4
      %575 = vperm.xlu0 %574, %v315
      %v576 = vpop.permute.xlu0 %575
      %579 = vset.pattern.permute.xlu0 4
      %580 = vperm.xlu0 %579, %v316
      %v581 = vpop.permute.xlu0 %580
      %v583 = vmul.f32 %v569, %v576
      %v584 = vmul.f32 %v570, %v576
      %v585 = vmul.f32 %v571, %v581
      %v586 = vmul.f32 %v572, %v581
      %587 = vset.pattern.permute.xlu0 5
      %588 = vperm.xlu0 %587, %v315
      %v589 = vpop.permute.xlu0 %588
      %591 = vset.pattern.permute.xlu0 5
      %592 = vperm.xlu0 %591, %v316
      %v593 = vpop.permute.xlu0 %592
      %v595 = vadd.f32 %v583, %v589
      %v596 = vadd.f32 %v584, %v589
      %v597 = vadd.f32 %v585, %v593
      %v598 = vadd.f32 %v586, %v593
      %v599 = vmul.f32 %v315, %v547
      %v600 = vmul.f32 %v316, %v548
      %601 = vrot.lane.b32.xlu0 %v315, 127
      %v602 = vpop.permute.xlu0 %601
      %603 = vrot.lane.b32.xlu0 %v316, 127
      %v604 = vpop.permute.xlu0 %603
      %v607 = vadd.f32 %v599, %v602
      %v608 = vadd.f32 %v600, %v604
      %611 = vrot.lane.b32.xlu0 %v607, 6
      %v612 = vpop.permute.xlu0 %611
      %613 = vrot.lane.b32.xlu0 %v608, 6
      %v614 = vpop.permute.xlu0 %613
      %v617 = vmul.f32 %v315, %v612
      %v618 = vmul.f32 %v316, %v614
      %v619 = vsub.f32 1.0, %v315
      %v620 = vsub.f32 1.0, %v316
      %621 = vset.pattern.permute.xlu0 2
      %622 = vperm.xlu0 %621, %v315
      %v623 = vpop.permute.xlu0 %622
      %625 = vset.pattern.permute.xlu0 2
      %626 = vperm.xlu0 %625, %v316
      %v627 = vpop.permute.xlu0 %626
      %v629 = vmul.f32 %v623, %v595
      %v630 = vmul.f32 %v623, %v596
      %v631 = vmul.f32 %v627, %v597
      %v632 = vmul.f32 %v627, %v598
      %633 = vset.pattern.permute.xlu0 3
      %634 = vperm.xlu0 %633, %v315
      %v635 = vpop.permute.xlu0 %634
      %637 = vset.pattern.permute.xlu0 3
      %638 = vperm.xlu0 %637, %v316
      %v639 = vpop.permute.xlu0 %638
      %v641 = vadd.f32 %v629, %v635
      %v642 = vadd.f32 %v630, %v635
      %v643 = vadd.f32 %v631, %v639
      %v644 = vadd.f32 %v632, %v639
      %646 = vset.pattern.permute.xlu0 6
      %647 = vperm.xlu0 %646, %v619
      %v648 = vpop.permute.xlu0 %647
      %651 = vset.pattern.permute.xlu0 6
      %652 = vperm.xlu0 %651, %v620
      %v653 = vpop.permute.xlu0 %652
      %v655 = vmul.f32 %v648, %v641
      %v656 = vmul.f32 %v648, %v642
      %v657 = vmul.f32 %v653, %v643
      %v658 = vmul.f32 %v653, %v644
      %660 = vset.pattern.permute.xlu0 6
      %661 = vperm.xlu0 %660, %v617
      %v662 = vpop.permute.xlu0 %661
      %665 = vset.pattern.permute.xlu0 6
      %666 = vperm.xlu0 %665, %v618
      %v667 = vpop.permute.xlu0 %666
      %v669 = vadd.f32 %v662, %v655
      %v670 = vadd.f32 %v662, %v656
      %v671 = vadd.f32 %v667, %v657
      %v672 = vadd.f32 %v667, %v658
      %v673 = vxor.u32 %v669, 2147483648
      %v674 = vxor.u32 %v670, 2147483648
      %v675 = vxor.u32 %v671, 2147483648
      %v676 = vxor.u32 %v672, 2147483648
      %v677 = vmul.f32 %v673, 1.442695
      %v678 = vpow.pop %v677
      %v679 = vmul.f32 %v674, 1.442695
      %v680 = vpow.pop %v679
      %v681 = vmul.f32 %v675, 1.442695
      %v682 = vpow.pop %v681
      %v683 = vmul.f32 %v676, 1.442695
      %v684 = vpow.pop %v683
      %v685 = vadd.f32 %v678, 1.0
      %v686 = vadd.f32 %v680, 1.0
      %v687 = vadd.f32 %v682, 1.0
      %v688 = vadd.f32 %v684, 1.0
      %v689 = vrcp.pop %v685
      %v690 = vmul.f32 1.0, %v689
      %v691 = vrcp.pop %v686
      %v692 = vmul.f32 1.0, %v691
      %v693 = vrcp.pop %v687
      %v694 = vmul.f32 1.0, %v693
      %v695 = vrcp.pop %v688
      %v696 = vmul.f32 1.0, %v695
      %v697 = vmul.f32 %v431, %v690
      %v698 = vmul.f32 %v432, %v692
      %v699 = vmul.f32 %v433, %v694
      %v700 = vmul.f32 %v434, %v696
      %v701 = vld [vmem:[%s3] sm:$0xf]
      %v702 = vld [vmem:[%s3 + $0x4] sm:$0xf]
      %v703 = vld [vmem:[%s3 + $0x8] sm:$0xf]
      %v704 = vld [vmem:[%s3 + $0xc] sm:$0xf]
      %v705 = vpack.c.bf16 %v699, %v697
      %v706 = vpack.c.bf16 %v700, %v698
      %v707 = vld [vmem:[%s4] sm:$0xf]
      %v708 = vld [vmem:[%s4 + $0x4] sm:$0xf]
      %v709 = vld [vmem:[%s4 + $0x8] sm:$0xf]
      %v710 = vld [vmem:[%s4 + $0xc] sm:$0xf]
      %v711 = vpack.c.bf16 %v538, %v536
      %v712 = vpack.c.bf16 %v539, %v537
      %v717 = vunpack.c.l.b16 %v707
      %v718 = vunpack.c.l.b16 %v708
      %v719 = vunpack.c.l.b16 %v709
      %v720 = vunpack.c.l.b16 %v710
      %v721 = vpack.c.b16 %v718, %v717
      %v722 = vpack.c.b16 %v720, %v719
      %v724 = vsel %vm334, %v721, 0
      %v727 = vsel %vm334, %v722, 0
      %729 = vmatprep.subr.bf16.mxu0 %v712
      %730 = vmatpush1.bf16.msra.mxu0 %v711
      %731 = vmatprep.subr.bf16.mxu0 0
      %732 = vmatpush1.bf16.msra.mxu0 0
      %733 = vmatprep.subr.bf16.mxu0 0
      %734 = vmatpush1.bf16.msra.mxu0 0
      %735 = vmatprep.subr.bf16.mxu0 0
      %736 = vmatpush1.bf16.msra.mxu0 0
      %737 = vmatprep.subr.bf16.mxu0 0
      %738 = vmatpush1.bf16.msra.mxu0 0
      %739 = vmatprep.subr.bf16.mxu0 0
      %740 = vmatpush1.bf16.msra.mxu0 0
      %741 = vmatprep.subr.bf16.mxu0 0
      %742 = vmatpush1.bf16.msra.mxu0 0
      %743 = vmatprep.subr.bf16.mxu0 0
      %744 = vmatpush1.bf16.msra.mxu0 0
      %745 = vmatprep.subr.bf16.mxu0 0
      %746 = vmatpush1.bf16.msra.mxu0 0
      %747 = vmatprep.subr.bf16.mxu0 0
      %748 = vmatpush1.bf16.msra.mxu0 0
      %749 = vmatprep.subr.bf16.mxu0 0
      %750 = vmatpush1.bf16.msra.mxu0 0
      %751 = vmatprep.subr.bf16.mxu0 0
      %752 = vmatpush1.bf16.msra.mxu0 0
      %753 = vmatprep.subr.bf16.mxu0 0
      %754 = vmatpush1.bf16.msra.mxu0 0
      %755 = vmatprep.subr.bf16.mxu0 0
      %756 = vmatpush1.bf16.msra.mxu0 0
      %757 = vmatprep.subr.bf16.mxu0 0
      %758 = vmatpush1.bf16.msra.mxu0 0
      %759 = vmatprep.subr.bf16.mxu0 0
      %760 = vmatpush1.bf16.msra.mxu0 0
      %761 = vmatprep.mubr.bf16.mxu0 0
      %762 = vmatmul.mubr.bf16.gmra.mrb[0].mxu0 %v724
      %v763 = vpop.f32.mrb[0].mxu0
      %v764 = vadd.f32 0.0, %v763
      %v765 = vpop.f32.mrb[0].mxu0
      %v766 = vadd.f32 0.0, %v765
      %v767 = vpop.f32.mrb[0].mxu0
      %v768 = vadd.f32 0.0, %v767
      %v769 = vpop.f32.mrb[0].mxu0
      %v770 = vadd.f32 0.0, %v769
      %771 = vmatprep.mubr.bf16.mxu0 0
      %772 = vmatmul.mubr.bf16.gmra.mrb[0].mxu0 %v727
      %v773 = vpop.f32.mrb[0].mxu0
      %v774 = vadd.f32 0.0, %v773
      %v775 = vpop.f32.mrb[0].mxu0
      %v776 = vadd.f32 0.0, %v775
      %v777 = vpop.f32.mrb[0].mxu0
      %v778 = vadd.f32 0.0, %v777
      %v779 = vpop.f32.mrb[0].mxu0
      %v780 = vadd.f32 0.0, %v779
      %781 = vdwg.mxu0
      %v786 = vunpack.c.l.b16 %v701
      %v787 = vunpack.c.l.b16 %v702
      %v788 = vunpack.c.l.b16 %v703
      %v789 = vunpack.c.l.b16 %v704
      %v790 = vpack.c.b16 %v787, %v786
      %v791 = vpack.c.b16 %v789, %v788
      %v793 = vsel %vm334, %v790, 0
      %v796 = vsel %vm334, %v791, 0
      %798 = vmatprep.subr.bf16.mxu0 %v706
      %799 = vmatpush1.bf16.msra.mxu0 %v705
      %800 = vmatprep.subr.bf16.mxu0 0
      %801 = vmatpush1.bf16.msra.mxu0 0
      %802 = vmatprep.subr.bf16.mxu0 0
      %803 = vmatpush1.bf16.msra.mxu0 0
      %804 = vmatprep.subr.bf16.mxu0 0
      %805 = vmatpush1.bf16.msra.mxu0 0
      %806 = vmatprep.subr.bf16.mxu0 0
      %807 = vmatpush1.bf16.msra.mxu0 0
      %808 = vmatprep.subr.bf16.mxu0 0
      %809 = vmatpush1.bf16.msra.mxu0 0
      %810 = vmatprep.subr.bf16.mxu0 0
      %811 = vmatpush1.bf16.msra.mxu0 0
      %812 = vmatprep.subr.bf16.mxu0 0
      %813 = vmatpush1.bf16.msra.mxu0 0
      %814 = vmatprep.subr.bf16.mxu0 0
      %815 = vmatpush1.bf16.msra.mxu0 0
      %816 = vmatprep.subr.bf16.mxu0 0
      %817 = vmatpush1.bf16.msra.mxu0 0
      %818 = vmatprep.subr.bf16.mxu0 0
      %819 = vmatpush1.bf16.msra.mxu0 0
      %820 = vmatprep.subr.bf16.mxu0 0
      %821 = vmatpush1.bf16.msra.mxu0 0
      %822 = vmatprep.subr.bf16.mxu0 0
      %823 = vmatpush1.bf16.msra.mxu0 0
      %824 = vmatprep.subr.bf16.mxu0 0
      %825 = vmatpush1.bf16.msra.mxu0 0
      %826 = vmatprep.subr.bf16.mxu0 0
      %827 = vmatpush1.bf16.msra.mxu0 0
      %828 = vmatprep.subr.bf16.mxu0 0
      %829 = vmatpush1.bf16.msra.mxu0 0
      %830 = vmatprep.mubr.bf16.mxu0 0
      %831 = vmatmul.mubr.bf16.gmra.mrb[0].mxu0 %v793
      %v832 = vpop.f32.mrb[0].mxu0
      %v833 = vadd.f32 %v764, %v832
      %v834 = vpop.f32.mrb[0].mxu0
      %v835 = vadd.f32 %v766, %v834
      %v836 = vpop.f32.mrb[0].mxu0
      %v837 = vadd.f32 %v768, %v836
      %v838 = vpop.f32.mrb[0].mxu0
      %v839 = vadd.f32 %v770, %v838
      %840 = vmatprep.mubr.bf16.mxu0 0
      %841 = vmatmul.mubr.bf16.gmra.mrb[0].mxu0 %v796
      %v842 = vpop.f32.mrb[0].mxu0
      %v843 = vadd.f32 %v774, %v842
      %v844 = vpop.f32.mrb[0].mxu0
      %v845 = vadd.f32 %v776, %v844
      %v846 = vpop.f32.mrb[0].mxu0
      %v847 = vadd.f32 %v778, %v846
      %v848 = vpop.f32.mrb[0].mxu0
      %v849 = vadd.f32 %v780, %v848
      %850 = vdwg.mxu0
      %852 = vset.pattern.permute.xlu0 0
      %853 = vperm.xlu0 %852, %v311
      %v854 = vpop.permute.xlu0 %853
      %857 = vset.pattern.permute.xlu0 0
      %858 = vperm.xlu0 %857, %v312
      %v859 = vpop.permute.xlu0 %858
      %862 = vset.pattern.permute.xlu0 0
      %863 = vperm.xlu0 %862, %v313
      %v864 = vpop.permute.xlu0 %863
      %867 = vset.pattern.permute.xlu0 0
      %868 = vperm.xlu0 %867, %v314
      %v869 = vpop.permute.xlu0 %868
      %v871 = vmul.f32 %v833, %v854
      %v872 = vmul.f32 %v835, %v854
      %v873 = vmul.f32 %v837, %v859
      %v874 = vmul.f32 %v839, %v859
      %v875 = vmul.f32 %v843, %v864
      %v876 = vmul.f32 %v845, %v864
      %v877 = vmul.f32 %v847, %v869
      %v878 = vmul.f32 %v849, %v869
      %879 = vset.pattern.permute.xlu0 1
      %880 = vperm.xlu0 %879, %v311
      %v881 = vpop.permute.xlu0 %880
      %883 = vset.pattern.permute.xlu0 1
      %884 = vperm.xlu0 %883, %v312
      %v885 = vpop.permute.xlu0 %884
      %887 = vset.pattern.permute.xlu0 1
      %888 = vperm.xlu0 %887, %v313
      %v889 = vpop.permute.xlu0 %888
      %891 = vset.pattern.permute.xlu0 1
      %892 = vperm.xlu0 %891, %v314
      %v893 = vpop.permute.xlu0 %892
      %v895 = vadd.f32 %v871, %v881
      %v896 = vadd.f32 %v872, %v881
      %v897 = vadd.f32 %v873, %v885
      %v898 = vadd.f32 %v874, %v885
      %v899 = vadd.f32 %v875, %v889
      %v900 = vadd.f32 %v876, %v889
      %v901 = vadd.f32 %v877, %v893
      %v902 = vadd.f32 %v878, %v893
      %v903 = vxor.u32 %v895, 2147483648
      %v904 = vxor.u32 %v896, 2147483648
      %v905 = vxor.u32 %v897, 2147483648
      %v906 = vxor.u32 %v898, 2147483648
      %v907 = vxor.u32 %v899, 2147483648
      %v908 = vxor.u32 %v900, 2147483648
      %v909 = vxor.u32 %v901, 2147483648
      %v910 = vxor.u32 %v902, 2147483648
      %v911 = vmul.f32 %v903, 1.442695
      %v912 = vpow.pop %v911
      %v913 = vmul.f32 %v904, 1.442695
      %v914 = vpow.pop %v913
      %v915 = vmul.f32 %v905, 1.442695
      %v916 = vpow.pop %v915
      %v917 = vmul.f32 %v906, 1.442695
      %v918 = vpow.pop %v917
      %v919 = vmul.f32 %v907, 1.442695
      %v920 = vpow.pop %v919
      %v921 = vmul.f32 %v908, 1.442695
      %v922 = vpow.pop %v921
      %v923 = vmul.f32 %v909, 1.442695
      %v924 = vpow.pop %v923
      %v925 = vmul.f32 %v910, 1.442695
      %v926 = vpow.pop %v925
      %v927 = vadd.f32 %v912, 1.0
      %v928 = vadd.f32 %v914, 1.0
      %v929 = vadd.f32 %v916, 1.0
      %v930 = vadd.f32 %v918, 1.0
      %v931 = vadd.f32 %v920, 1.0
      %v932 = vadd.f32 %v922, 1.0
      %v933 = vadd.f32 %v924, 1.0
      %v934 = vadd.f32 %v926, 1.0
      %v935 = vrcp.pop %v927
      %v936 = vmul.f32 1.0, %v935
      %v937 = vrcp.pop %v928
      %v938 = vmul.f32 1.0, %v937
      %v939 = vrcp.pop %v929
      %v940 = vmul.f32 1.0, %v939
      %v941 = vrcp.pop %v930
      %v942 = vmul.f32 1.0, %v941
      %v943 = vrcp.pop %v931
      %v944 = vmul.f32 1.0, %v943
      %v945 = vrcp.pop %v932
      %v946 = vmul.f32 1.0, %v945
      %v947 = vrcp.pop %v933
      %v948 = vmul.f32 1.0, %v947
      %v949 = vrcp.pop %v934
      %v950 = vmul.f32 1.0, %v949
      %v951 = vmul.f32 %v895, %v936
      %v952 = vmul.f32 %v896, %v938
      %v953 = vmul.f32 %v897, %v940
      %v954 = vmul.f32 %v898, %v942
      %v955 = vmul.f32 %v899, %v944
      %v956 = vmul.f32 %v900, %v946
      %v957 = vmul.f32 %v901, %v948
      %v958 = vmul.f32 %v902, %v950
      %959 = vst [vmem:[%s305] sm:$0xff] %v951
      %960 = vst [vmem:[%s305 + $0x8] sm:$0xff] %v952
      %961 = vst [vmem:[%s305 + $0x10] sm:$0xff] %v953
      %962 = vst [vmem:[%s305 + $0x18] sm:$0xff] %v954
      %963 = vst [vmem:[%s305 + $0x20] sm:$0xff] %v955
      %964 = vst [vmem:[%s305 + $0x28] sm:$0xff] %v956
      %965 = vst [vmem:[%s305 + $0x30] sm:$0xff] %v957
      %966 = vst [vmem:[%s305 + $0x38] sm:$0xff] %v958
      %p967 = scmp.lt.s32.totalorder %s19, 1
      %s968 = scalar_select %p967, %s19, 1
      %s969 = smul.addr %s968, 8
      %s970 = smul.addr %s969, 8
      %s971 = scalar_lea.vmem %s8, %s970
      // Predicated region
      $region53: #{_lambda_.1} parent=51 // pred_check
        %p972 = pneg %p210
      $region54: #{_lambda_.1} parent=51 // pred_check_branch
        %974 = sbr.rel (%p972) target = $region56
      $region55: #{_lambda_.1} parent=51 // pred_region
        _
      $region56: #{_lambda_.1} parent=51 // pred_fallthru
        _
    $region52: #{_lambda_.1} parent=5 // pred_fallthru
      _
    %p975 = scmp.le.s32.totalorder 2, %s14
    // Predicated region
    $region57: #{_lambda_.1} parent=5 // pred_check
      %p976 = pneg %p975
    $region58: #{_lambda_.1} parent=5 // pred_check_branch
      %978 = sbr.rel (%p976) target = $region60
    $region59: #{_lambda_.1} parent=5 // pred_region
      %s979 = ssub.s32 %s14, 2
      // Predicated region
      $region61: #{_lambda_.1} parent=59 // pred_check
        %p980 = pneg %p216
      $region62: #{_lambda_.1} parent=59 // pred_check_branch
        %982 = sbr.rel (%p980) target = $region64
      $region63: #{_lambda_.1} parent=59 // pred_region
        %p983 = scmp.lt.s32.totalorder %s20, 1
        %s984 = scalar_select %p983, %s20, 1
        %s985 = smul.addr %s984, 8
        %s986 = smul.addr %s985, 8
        %s987 = scalar_lea.vmem %s8, %s986
      $region64: #{_lambda_.1} parent=59 // pred_fallthru
        _
    $region60: #{_lambda_.1} parent=5 // pred_fallthru
      _
  $region6: #{_lambda_.1} parent=0 // loop_footer
    %s18 = sadd.s32 1, %s14
  $region7: #{_lambda_.1} parent=0 // loop_footer_branch
    %13 = sbr.rel target = $region3
  $region8: #{_lambda_.1} parent=0 // loop_exit
    _

</llo_original>
